<compile_context>
chip_gen: v7x
topology: tpu7x:2x2x1
jax: 0.10.0
libtpu: 0.0.40
codegen_flags: <defaults>
</compile_context>

<pallas_src>
import math

import jax
import jax.numpy as jnp
from jax.experimental import pallas as pl
from jax.experimental.pallas import tpu as pltpu

LANE = 128


def _round_up(v, m):
    return (v + m - 1) // m * m


# ----------------------------------------------------------------------------
# Conv (implicit GEMM) kernel: grid = (N, OH, KH), reduction over KH.
# ----------------------------------------------------------------------------

def _make_conv_kernel(kh, kw, ow, cout, mode, label):
    """mode in {"lrelu_bias", "bn_stats", "final_mse"}."""
    has_bias = mode in ("lrelu_bias", "final_mse")

    def kernel(*refs):
        i = 0
        x_ref = refs[i]; i += 1                 # (WP, Cin)   bf16
        w_ref = refs[i]; i += 1                 # (KH*KW, Cin, Cout) bf16
        b_ref = None
        if has_bias:
            b_ref = refs[i]; i += 1             # (1, Cout)   f32
        if mode == "lrelu_bias":
            y_ref = refs[i]; i += 1             # (OW, Cout)  bf16
        elif mode == "bn_stats":
            y_ref = refs[i]; i += 1             # (OW, Cout)  bf16
            st_ref = refs[i]; i += 1            # (2, Cout)   f32
        else:  # final_mse
            sse_ref = refs[i]; i += 1           # (1, Cout)   f32
        acc_ref = refs[i]                       # (OW, Cout)  f32 scratch

        dh = pl.program_id(2)

        @pl.when(dh == 0)
        def _init():
            acc_ref[...] = jnp.zeros_like(acc_ref)

        xr = x_ref[...]                         # one padded input row (bf16)
        acc = acc_ref[...]
        for dw in range(kw):                    # static loop over kernel cols
            w_tap = w_ref[dh * kw + dw]         # (Cin, Cout) bf16
            prod = jnp.dot(xr, w_tap, preferred_element_type=jnp.float32)
            acc = acc + prod[dw:dw + ow, :]     # shift handled on f32 result
        acc_ref[...] = acc

        @pl.when(dh == kh - 1)
        def _finalize():
            if mode == "lrelu_bias":
                a = acc + b_ref[...]
                a = jnp.where(a > 0, a, 0.2 * a)
                y_ref[...] = a.astype(y_ref.dtype)
            elif mode == "bn_stats":
                y_ref[...] = acc.astype(y_ref.dtype)
                s1 = jnp.sum(acc, axis=0, keepdims=True)
                s2 = jnp.sum(acc * acc, axis=0, keepdims=True)
                st_ref[...] = jnp.concatenate([s1, s2], axis=0)
            else:  # final_mse: only lane 0 is the real prediction channel
                pred = acc[:, 0:1] + b_ref[0:1, 0:1]
                err = pred - label
                sse = jnp.sum(err * err, axis=0, keepdims=True)      # (1, 1)
                lane = jax.lax.broadcasted_iota(jnp.int32, (1, cout), 1)
                sse_ref[...] = jnp.where(
                    lane == 0, jnp.broadcast_to(sse, (1, cout)), 0.0)

    return kernel


def conv_pallas(xpp, w_mat, bias, *, kh, kw, mode, label=0.0):
    """xpp: (N, HP, WP, Cin) bf16 (already spatially padded / s2d-repacked).
       w_mat: (KH*KW, Cin, Cout_pad) bf16.  bias: (1, Cout_pad) f32 or None."""
    N, HP, WP, Cin = xpp.shape
    KK, Cin_w, Cout = w_mat.shape
    assert Cin_w == Cin and KK == kh * kw
    OH, OW = HP - kh + 1, WP - kw + 1

    kernel = _make_conv_kernel(kh, kw, OW, Cout, mode, label)

    in_specs = [
        pl.BlockSpec((None, None, WP, Cin), lambda n, oh, dh: (n, oh + dh, 0, 0)),
        pl.BlockSpec((KK, Cin, Cout), lambda n, oh, dh: (0, 0, 0)),
    ]
    inputs = [xpp, w_mat]
    if mode in ("lrelu_bias", "final_mse"):
        in_specs.append(pl.BlockSpec((1, Cout), lambda n, oh, dh: (0, 0)))
        inputs.append(bias)

    y_spec = pl.BlockSpec((None, None, OW, Cout), lambda n, oh, dh: (n, oh, 0, 0))
    if mode == "lrelu_bias":
        out_shape = jax.ShapeDtypeStruct((N, OH, OW, Cout), jnp.bfloat16)
        out_specs = y_spec
    elif mode == "bn_stats":
        out_shape = (jax.ShapeDtypeStruct((N, OH, OW, Cout), jnp.bfloat16),
                     jax.ShapeDtypeStruct((N, OH, 2, Cout), jnp.float32))
        out_specs = (y_spec,
                     pl.BlockSpec((None, None, 2, Cout),
                                  lambda n, oh, dh: (n, oh, 0, 0)))
    else:  # final_mse
        out_shape = jax.ShapeDtypeStruct((N, OH, 1, Cout), jnp.float32)
        out_specs = pl.BlockSpec((None, None, 1, Cout),
                                 lambda n, oh, dh: (n, oh, 0, 0))

    return pl.pallas_call(
        kernel,
        out_shape=out_shape,
        grid_spec=pltpu.PrefetchScalarGridSpec(
            num_scalar_prefetch=0,
            grid=(N, OH, kh),
            in_specs=in_specs,
            out_specs=out_specs,
            scratch_shapes=[pltpu.VMEM((OW, Cout), jnp.float32)]),
        compiler_params=pltpu.CompilerParams(
            dimension_semantics=("parallel", "parallel", "arbitrary"),
            vmem_limit_bytes=32 * 1024 * 1024),
    )(*inputs)


# ----------------------------------------------------------------------------
# BatchNorm (training-mode batch stats) + LeakyReLU, tiled normalize pass.
# ----------------------------------------------------------------------------

def bn_lrelu_pallas(y, stats2c, gamma, beta):
    """y: (N, OH, OW, C) bf16.  stats2c: (2, C) f32 = [sum, sum_sq] over N*OH*OW."""
    N, OH, OW, C = y.shape
    inv_count = 1.0 / float(N * OH * OW)

    def kernel(y_ref, s_ref, g_ref, b_ref, o_ref):
        ys = y_ref[...].astype(jnp.float32)           # (OW, C)
        s = s_ref[...]                                # (2, C)
        mean = s[0:1, :] * inv_count
        ex2 = s[1:2, :] * inv_count
        var = jnp.maximum(ex2 - mean * mean, 0.0)     # biased batch variance
        inv = jax.lax.rsqrt(var + 1e-5)
        scale = inv * g_ref[...]
        shift = b_ref[...] - mean * scale
        v = ys * scale + shift
        v = jnp.where(v > 0, v, 0.2 * v)
        o_ref[...] = v.astype(o_ref.dtype)

    return pl.pallas_call(
        kernel,
        out_shape=jax.ShapeDtypeStruct((N, OH, OW, C), jnp.bfloat16),
        grid_spec=pltpu.PrefetchScalarGridSpec(
            num_scalar_prefetch=0,
            grid=(N, OH),
            in_specs=[
                pl.BlockSpec((None, None, OW, C), lambda n, oh: (n, oh, 0, 0)),
                pl.BlockSpec((2, C), lambda n, oh: (0, 0)),
                pl.BlockSpec((1, C), lambda n, oh: (0, 0)),
                pl.BlockSpec((1, C), lambda n, oh: (0, 0)),
            ],
            out_specs=pl.BlockSpec((None, None, OW, C),
                                   lambda n, oh: (n, oh, 0, 0))),
        compiler_params=pltpu.CompilerParams(
            dimension_semantics=("parallel", "parallel"),
            vmem_limit_bytes=32 * 1024 * 1024),
    )(y, stats2c, gamma, beta)


# ----------------------------------------------------------------------------
# MSE finalize: reduce the per-row SSE partials produced by the final conv.
# ----------------------------------------------------------------------------

def mse_finalize_pallas(sse_parts, count):
    N, OH, _, C = sse_parts.shape
    R = N * OH
    parts = sse_parts.reshape(R, C)        # only lane 0 is nonzero
    inv_count = 1.0 / float(count)

    def kernel(p_ref, o_ref):
        t = jnp.sum(p_ref[...], axis=0, keepdims=True)   # (1, C)
        t = jnp.sum(t, axis=1, keepdims=True)            # (1, 1)
        o_ref[...] = jnp.broadcast_to(t * inv_count, (1, C))

    out = pl.pallas_call(
        kernel,
        out_shape=jax.ShapeDtypeStruct((1, C), jnp.float32),
        grid=(1,),
        in_specs=[pl.BlockSpec((R, C), lambda i: (0, 0))],
        out_specs=pl.BlockSpec((1, C), lambda i: (0, 0)),
    )(parts)
    return out[0, 0]


# ----------------------------------------------------------------------------
# Parameter construction (mirrors the PyTorch module for n_layers=4).
# ----------------------------------------------------------------------------

def build_layer_configs(input_nc, ndf, n_layers=4):
    assert n_layers == 4, "demo replicates the n_layers=4 architecture"
    cfgs = [dict(cin=input_nc, cout=ndf, k=4, s=2, pad=1,
                 bias=True, bn=False, act=True)]
    nf_mult = 1
    for n in range(1, n_layers):
        nf_mult_prev = nf_mult
        nf_mult = min(2 ** n, 16)
        cfgs.append(dict(cin=ndf * nf_mult_prev, cout=ndf * nf_mult, k=4, s=2,
                         pad=1, bias=False, bn=True, act=True))
    nf_mult_prev = nf_mult
    nf_mult = min(2 ** n_layers, 4)
    cfgs.append(dict(cin=ndf * nf_mult_prev, cout=ndf * nf_mult, k=3, s=1,
                     pad=1, bias=False, bn=True, act=True))
    cfgs.append(dict(cin=ndf * nf_mult, cout=1, k=4, s=1, pad=1,
                     bias=True, bn=False, act=False))
    return cfgs


def init_raw_params(key, input_nc, ndf, n_layers=4):
    cfgs = build_layer_configs(input_nc, ndf, n_layers)
    params = []
    for cfg in cfgs:
        key, kw_, kb_, kg_ = jax.random.split(key, 4)
        cin, cout, k = cfg["cin"], cfg["cout"], cfg["k"]
        std = math.sqrt(2.0 / (cin * k * k))          # kaiming_normal_, fan_in
        p = dict(cfg)
        p["w"] = jax.random.normal(kw_, (k, k, cin, cout), jnp.float32) * std
        p["b"] = (jax.random.normal(kb_, (cout,), jnp.float32)
                  if cfg["bias"] else None)
        if cfg["bn"]:
            p["gamma"] = 1.0 + 0.02 * jax.random.normal(kg_, (cout,), jnp.float32)
            p["beta"] = jnp.zeros((cout,), jnp.float32)
        params.append(p)
    return params


def prepare_params(raw_params, input_nc):
    """Pad channels to 128 lanes, fold stride-2 k=4 into stride-1 k=2 via
    space-to-depth weight rearrangement, flatten taps to a (KK, Cin, Cout)
    bf16 matrix for the kernel."""
    prepped = []
    c_carried = input_nc                       # activation channels entering layer
    for rp in raw_params:
        cin, cout, k, s = rp["cin"], rp["cout"], rp["k"], rp["s"]
        cout_p = _round_up(cout, LANE)
        w = jnp.pad(rp["w"], ((0, 0), (0, 0),
                              (0, c_carried - cin), (0, cout_p - cout)))
        if s == 2:                             # 4x4 stride-2 -> 2x2 stride-1 on s2d
            kh = kw = 2
            w = (w.reshape(2, 2, 2, 2, c_carried, cout_p)
                   .transpose(0, 2, 1, 3, 4, 5)
                   .reshape(2, 2, 4 * c_carried, cout_p))
            cin_k = 4 * c_carried
        else:
            kh = kw = k
            cin_k = c_carried
        q = dict(s=s, pad=rp["pad"], bn=rp["bn"], kh=kh, kw=kw, cout_p=cout_p)
        q["w_mat"] = w.reshape(kh * kw, cin_k, cout_p).astype(jnp.bfloat16)
        if rp["b"] is not None:
            q["bias"] = jnp.pad(rp["b"], (0, cout_p - cout)).reshape(1, cout_p)
        else:
            q["bias"] = None
        if rp["bn"]:
            # padded channels: gamma=0, beta=0 so they stay exactly zero.
            q["gamma"] = jnp.pad(rp["gamma"], (0, cout_p - cout)).reshape(1, cout_p)
            q["beta"] = jnp.pad(rp["beta"], (0, cout_p - cout)).reshape(1, cout_p)
        prepped.append(q)
        c_carried = cout_p
    return prepped


# ----------------------------------------------------------------------------
# Forward + loss (matches NLayerDiscriminator.forward semantics).
# ----------------------------------------------------------------------------

def _space_to_depth(xp):
    Nb, Hp, Wp, Cc = xp.shape
    assert Hp % 2 == 0 and Wp % 2 == 0
    return (xp.reshape(Nb, Hp // 2, 2, Wp // 2, 2, Cc)
              .transpose(0, 1, 3, 2, 4, 5)
              .reshape(Nb, Hp // 2, Wp // 2, 4 * Cc))


def nlayer_discriminator_loss(prepped, trainG, trainReal, real_AB, fake_AB):
    # trainG / trainReal are Python bools (static control flow, as in PyTorch).
    if trainG:
        inp, label = fake_AB, 1.0
    elif trainReal:
        inp, label = real_AB, 1.0
    else:
        inp, label = fake_AB, 0.0          # .detach() is a no-op for inference

    x = jnp.transpose(inp, (0, 2, 3, 1)).astype(jnp.bfloat16)   # NCHW -> NHWC
    last = len(prepped) - 1
    for li, q in enumerate(prepped):
        pad = q["pad"]
        xp = jnp.pad(x, ((0, 0), (pad, pad), (pad, pad), (0, 0)))
        if q["s"] == 2:
            xp = _space_to_depth(xp)       # plain-JAX repack: stride-2 -> stride-1
        if li == last:
            N_, HP, WP, _ = xp.shape
            OHf, OWf = HP - q["kh"] + 1, WP - q["kw"] + 1
            sse_parts = conv_pallas(xp, q["w_mat"], q["bias"],
                                    kh=q["kh"], kw=q["kw"],
                                    mode="final_mse", label=label)
            return mse_finalize_pallas(sse_parts, count=N_ * OHf * OWf)
        if q["bn"]:
            y, stats_parts = conv_pallas(xp, q["w_mat"], None,
                                         kh=q["kh"], kw=q["kw"], mode="bn_stats")
            stats = jnp.sum(stats_parts, axis=(0, 1))   # tiny (2, C) glue reduction
            x = bn_lrelu_pallas(y, stats, q["gamma"], q["beta"])
        else:
            x = conv_pallas(xp, q["w_mat"], q["bias"],
                            kh=q["kh"], kw=q["kw"], mode="lrelu_bias")


# ----------------------------------------------------------------------------
# Main
# ----------------------------------------------------------------------------

if __name__ == "__main__":
    key = jax.random.PRNGKey(0)
    k_real, k_fake, k_par = jax.random.split(key, 3)

    # 4 stride-2 convs -> spatial must be divisible by 16.
    N, C, H, W = 2, 4, 32, 32
    real_AB = jax.random.normal(k_real, (N, C, H, W), jnp.float32)
    fake_AB = jax.random.normal(k_fake, (N, C, H, W), jnp.float32)

    raw_params = init_raw_params(k_par, input_nc=C, ndf=8, n_layers=4)
    prepped = prepare_params(raw_params, input_nc=C)

    errD = nlayer_discriminator_loss(prepped, trainG=True, trainReal=False,
                                     real_AB=real_AB, fake_AB=fake_AB)
    jax.block_until_ready(errD)
    print("KERNEL_OK")
</pallas_src>

<mosaic_0001>
module attributes {stable_mosaic.version = 11 : i64} {
  func.func @kernel(%arg0: i32, %arg1: i32, %arg2: i32, %arg3: memref<1x1x17x16xbf16, #tpu.memory_space<vmem>>, %arg4: memref<4x16x128xbf16, #tpu.memory_space<vmem>>, %arg5: memref<1x128xf32, #tpu.memory_space<vmem>>, %arg6: memref<1x1x16x128xbf16, #tpu.memory_space<vmem>>, %arg7: memref<16x128xf32, #tpu.memory_space<vmem>>) attributes {dimension_semantics = [#tpu.dimension_semantics<parallel>, #tpu.dimension_semantics<parallel>, #tpu.dimension_semantics<arbitrary>], iteration_bounds = array<i64: 2, 16, 2>, scalar_prefetch = 0 : i64, scratch_operands = 1 : i64, tpu.core_type = #tpu.core_type<tc>, window_params = [{transform_indices = @transform_0, window_bounds = array<i64: 1, 1, 17, 16>}, {pipeline_mode = #tpu.pipeline_mode<synchronous>, transform_indices = @transform_1, window_bounds = array<i64: 4, 16, 128>}, {pipeline_mode = #tpu.pipeline_mode<synchronous>, transform_indices = @transform_2, window_bounds = array<i64: 1, 128>}, {transform_indices = @transform_3, window_bounds = array<i64: 1, 1, 16, 128>}]} {
    %c0_i32 = arith.constant 0 : i32
    %0 = arith.cmpi eq, %arg2, %c0_i32 : i32
    %1 = arith.extui %0 : i1 to i32
    %c0_i32_0 = arith.constant 0 : i32
    %2 = arith.cmpi ne, %1, %c0_i32_0 : i32
    scf.if %2 {
      %cst_17 = arith.constant 0.000000e+00 : f32
      %26 = vector.broadcast %cst_17 : f32 to vector<16x128xf32>
      %c0_18 = arith.constant 0 : index
      %c0_19 = arith.constant 0 : index
      %27 = vector.load %arg7[%c0_18, %c0_19] : memref<16x128xf32, #tpu.memory_space<vmem>>, vector<16x128xf32>
      tpu.vector_store %arg7[%c0_18, %c0_19], %26 {strides = array<i32>} : memref<16x128xf32, #tpu.memory_space<vmem>>, vector<16x128xf32>,
    } else {
    }
    %c0 = arith.constant 0 : index
    %c0_1 = arith.constant 0 : index
    %c0_2 = arith.constant 0 : index
    %c0_3 = arith.constant 0 : index
    %3 = vector.load %arg3[%c0, %c0_1, %c0_2, %c0_3] : memref<1x1x17x16xbf16, #tpu.memory_space<vmem>>, vector<1x1x17x16xbf16>
    %4 = vector.shape_cast %3 : vector<1x1x17x16xbf16> to vector<17x16xbf16>
    %c0_4 = arith.constant 0 : index
    %c0_5 = arith.constant 0 : index
    %5 = vector.load %arg7[%c0_4, %c0_5] : memref<16x128xf32, #tpu.memory_space<vmem>>, vector<16x128xf32>
    %c2_i32 = arith.constant 2 : i32
    %6 = arith.muli %arg2, %c2_i32 : i32
    %c0_i32_6 = arith.constant 0 : i32
    %7 = arith.addi %6, %c0_i32_6 : i32
    %8 = arith.index_cast %7 : i32 to index
    %c0_7 = arith.constant 0 : index
    %c0_8 = arith.constant 0 : index
    %9 = vector.load %arg4[%8, %c0_7, %c0_8] : memref<4x16x128xbf16, #tpu.memory_space<vmem>>, vector<1x16x128xbf16>
    %10 = vector.shape_cast %9 : vector<1x16x128xbf16> to vector<16x128xbf16>
    %cst = arith.constant dense<0.000000e+00> : vector<17x128xf32>
    %11 = tpu.matmul %4, %10, %cst {dimension_numbers = #tpu.dot_dimension_numbers<[1], [0], [0], [1], [0, 0, 1, 1], [], []>} : vector<17x16xbf16>, vector<16x128xbf16>, vector<17x128xf32> -> vector<17x128xf32>
    %12 = vector.extract_strided_slice %11 {offsets = [0, 0], sizes = [16, 128], strides = [1, 1]} : vector<17x128xf32> to vector<16x128xf32>
    %13 = arith.addf %5, %12 : vector<16x128xf32>
    %c2_i32_9 = arith.constant 2 : i32
    %14 = arith.muli %arg2, %c2_i32_9 : i32
    %c1_i32 = arith.constant 1 : i32
    %15 = arith.addi %14, %c1_i32 : i32
    %16 = arith.index_cast %15 : i32 to index
    %c0_10 = arith.constant 0 : index
    %c0_11 = arith.constant 0 : index
    %17 = vector.load %arg4[%16, %c0_10, %c0_11] : memref<4x16x128xbf16, #tpu.memory_space<vmem>>, vector<1x16x128xbf16>
    %18 = vector.shape_cast %17 : vector<1x16x128xbf16> to vector<16x128xbf16>
    %cst_12 = arith.constant dense<0.000000e+00> : vector<17x128xf32>
    %19 = tpu.matmul %4, %18, %cst_12 {dimension_numbers = #tpu.dot_dimension_numbers<[1], [0], [0], [1], [0, 0, 1, 1], [], []>} : vector<17x16xbf16>, vector<16x128xbf16>, vector<17x128xf32> -> vector<17x128xf32>
    %20 = vector.extract_strided_slice %19 {offsets = [1, 0], sizes = [16, 128], strides = [1, 1]} : vector<17x128xf32> to vector<16x128xf32>
    %21 = arith.addf %13, %20 : vector<16x128xf32>
    %c0_13 = arith.constant 0 : index
    %c0_14 = arith.constant 0 : index
    %22 = vector.load %arg7[%c0_13, %c0_14] : memref<16x128xf32, #tpu.memory_space<vmem>>, vector<16x128xf32>
    tpu.vector_store %arg7[%c0_13, %c0_14], %21 {strides = array<i32>} : memref<16x128xf32, #tpu.memory_space<vmem>>, vector<16x128xf32>,
    %c1_i32_15 = arith.constant 1 : i32
    %23 = arith.cmpi eq, %arg2, %c1_i32_15 : i32
    %24 = arith.extui %23 : i1 to i32
    %c0_i32_16 = arith.constant 0 : i32
    %25 = arith.cmpi ne, %24, %c0_i32_16 : i32
    scf.if %25 {
      %c0_17 = arith.constant 0 : index
      %c0_18 = arith.constant 0 : index
      %26 = vector.load %arg5[%c0_17, %c0_18] : memref<1x128xf32, #tpu.memory_space<vmem>>, vector<1x128xf32>
      %27 = vector.broadcast %26 : vector<1x128xf32> to vector<16x128xf32>
      %28 = arith.addf %21, %27 : vector<16x128xf32>
      %cst_19 = arith.constant 0.000000e+00 : f32
      %29 = vector.broadcast %cst_19 : f32 to vector<16x128xf32>
      %30 = arith.cmpf ogt, %28, %29 : vector<16x128xf32>
      %cst_20 = arith.constant 2.000000e-01 : f32
      %31 = vector.broadcast %cst_20 : f32 to vector<16x128xf32>
      %32 = arith.mulf %31, %28 : vector<16x128xf32>
      %33 = arith.select %30, %28, %32 : vector<16x128xi1>, vector<16x128xf32>
      %34 = arith.truncf %33 : vector<16x128xf32> to vector<16x128xbf16>
      %c0_21 = arith.constant 0 : index
      %c0_22 = arith.constant 0 : index
      %c0_23 = arith.constant 0 : index
      %c0_24 = arith.constant 0 : index
      %35 = vector.load %arg6[%c0_21, %c0_22, %c0_23, %c0_24] : memref<1x1x16x128xbf16, #tpu.memory_space<vmem>>, vector<1x1x16x128xbf16>
      %36 = vector.shape_cast %35 : vector<1x1x16x128xbf16> to vector<16x128xbf16>
      %37 = vector.shape_cast %34 : vector<16x128xbf16> to vector<1x1x16x128xbf16>
      tpu.vector_store %arg6[%c0_21, %c0_22, %c0_23, %c0_24], %37 {strides = array<i32>} : memref<1x1x16x128xbf16, #tpu.memory_space<vmem>>, vector<1x1x16x128xbf16>,
    } else {
    }
    return
  }
  func.func @transform_0(%arg0: i32, %arg1: i32, %arg2: i32) -> (i32, i32, i32, i32) {
    %0 = arith.addi %arg1, %arg2 : i32
    %c0_i32 = arith.constant 0 : i32
    %c0_i32_0 = arith.constant 0 : i32
    %c0_i32_1 = arith.constant 0 : i32
    return %arg0, %0, %c0_i32, %c0_i32_0 : i32, i32, i32, i32
  }
  func.func @transform_1(%arg0: i32, %arg1: i32, %arg2: i32) -> (i32, i32, i32) {
    %c0_i32 = arith.constant 0 : i32
    %c0_i32_0 = arith.constant 0 : i32
    %c0_i32_1 = arith.constant 0 : i32
    %c0_i32_2 = arith.constant 0 : i32
    return %c0_i32, %c0_i32_0, %c0_i32_1 : i32, i32, i32
  }
  func.func @transform_2(%arg0: i32, %arg1: i32, %arg2: i32) -> (i32, i32) {
    %c0_i32 = arith.constant 0 : i32
    %c0_i32_0 = arith.constant 0 : i32
    %c0_i32_1 = arith.constant 0 : i32
    return %c0_i32, %c0_i32_0 : i32, i32
  }
  func.func @transform_3(%arg0: i32, %arg1: i32, %arg2: i32) -> (i32, i32, i32, i32) {
    %c0_i32 = arith.constant 0 : i32
    %c0_i32_0 = arith.constant 0 : i32
    %c0_i32_1 = arith.constant 0 : i32
    return %arg0, %arg1, %c0_i32, %c0_i32_0 : i32, i32, i32, i32
  }
}

</mosaic_0001>

<llo_original>
// kernel: tpu_custom_call.1
$region0: #{tpu_custom_call.1}
  #allocation0 [shape = 'u32[]', space=smem, size = 0x4, offset = 0x4, fixed_abs, tag = 'smem constant byte address 0x4 - core index']
  #allocation1 [shape = 'u32[144,128]{1,0:T(1,128)}', space=vmem, size = 0x12000, scoped, tag = 'internal scratch']
  #allocation2 [shape = 'f32[16,128]{1,0:T(8,128)}', space=vmem, size = 0x2000, scoped, tag = 'scratch operand']
  %s0 = inlined_call_operand.vmem [shape: bf16[2,17,17,16], index: 0, kind: input, shape index: {}]
  %s1 = inlined_call_operand.vmem [shape: bf16[4,16,128], index: 1, kind: input, shape index: {}]
  %s2 = inlined_call_operand.vmem [shape: f32[1,128], index: 2, kind: input, shape index: {}]
  %s3 = inlined_call_operand.hbm [shape: bf16[2,16,16,128], index: 3, kind: output, shape index: {}]
  %s4 = sld [smem:[#allocation0]]
  $region53: #{tpu_custom_call.1} parent=0
    _
  %s6 = ssub.s32 1, %s4
  %s7 = scalar_select 0, %s6, %s4
  $region1: #{tpu_custom_call.1} parent=0
    #allocation3 [shape = 'u8[8192]{0}', space=vmem, size = 0x2000, scoped, tag = 'output window, operand 0']
    #allocation4 [shape = 's32[2]{0}', space=sflag, size = 0x8, scoped, tag = 'scoped memory for tpu_custom_call.1']
    %8 = vsyncpa [#allocation4], 0
    %s9 = scalar_lea.sflag [#allocation4], 1
    %10 = vsyncpa %s9, 0
    loop: start=0, step=1, limit=66
    $region2: #{tpu_custom_call.1} parent=1 // loop_pre_header
      _
    $region3: #{tpu_custom_call.1} parent=1 // loop_header
      %s12 = sphi 0, %s16
      %p13 = scmp.ge.s32.totalorder %s12, 66
      %s19 = sphi 0, %s38
      %s20 = sphi 0, %s34
      %s21 = sphi 0, %s30
      %s22 = sphi 0, %s19
      %s23 = sphi 0, %s20
      %s24 = sphi 0, %s21
      %s25 = sphi 0, %s22
      %s26 = sphi 0, %s23
      %s27 = sphi 0, %s24
      %s45 = sphi 0, %s47
      %s48 = sphi 0, %s45
      %s49 = sphi 0, %s48
      %s65 = sphi 0, %s49
      %s69 = sphi 0, %s69
      %s71 = sphi 0, %s69
      %s72 = sphi 0, %s71
      %s86 = sphi 0, %s72
      %s90 = sphi 0, %s90
      %s92 = sphi 0, %s90
      %s93 = sphi 0, %s92
      %s107 = sphi 0, %s93
      %s115 = sphi 0, %s117
      %s118 = sphi 0, %s115
      %s119 = sphi 0, %s118
      %s135 = sphi 0, %s119
    $region4: #{tpu_custom_call.1} parent=1 // loop_header_branch
      %15 = sbr.rel (%p13) target = $region8
    $region5: #{tpu_custom_call.1} parent=1 // loop_body
      %s17 = ssub.s32 %s12, 1
      %s18 = ssub.s32 %s12, 2
      %s28 = sadd.s32 1, %s21
      %p29 = scmp.ge.s32.totalorder %s28, 2
      %s30 = scalar_select %p29, 0, %s28
      %s31 = sadd.s32 1, %s20
      %s32 = scalar_select %p29, %s31, %s20
      %p33 = scmp.ge.s32.totalorder %s32, 16
      %s34 = scalar_select %p33, 0, %s32
      %s35 = sadd.s32 1, %s19
      %s36 = scalar_select %p33, %s35, %s19
      %p37 = scmp.ge.s32.totalorder %s36, 2
      %s38 = scalar_select %p37, 0, %s36
      %s39 = sadd.s32 %s20, %s21
      %s40 = sadd.s32 %s34, %s30
      %s41 = ssub.s32 %s19, %s38
      %s42 = ssub.s32 %s39, %s40
      %s43 = sor.u32 %s41, %s42
      %p44 = scmp.eq.s32.totalorder %s43, 0
      %s46 = sadd.s32 %s45, 1
      %s47 = scalar_select %p44, %s45, %s46
      %p50 = pneg %p44
      %p51 = scmp.eq.s32.totalorder %s12, 63
      %p52 = por %p50, %p51
      %p53 = scmp.ne.s32.totalorder %s45, %s48
      %p54 = scmp.eq.s32.totalorder %s12, 0
      %p55 = por %p53, %p54
      %p56 = scmp.ne.s32.totalorder %s45, %s48
      %p57 = scmp.eq.s32.totalorder %s17, 63
      %p58 = por %p56, %p57
      %p59 = scmp.ne.s32.totalorder %s48, %s49
      %p60 = scmp.eq.s32.totalorder %s17, 0
      %p61 = por %p59, %p60
      %p62 = scmp.ne.s32.totalorder %s48, %s49
      %p63 = scmp.eq.s32.totalorder %s18, 63
      %p64 = por %p62, %p63
      %p66 = scmp.ne.s32.totalorder %s49, %s65
      %p67 = scmp.eq.s32.totalorder %s18, 0
      %p68 = por %p66, %p67
      %s70 = sadd.s32 %s69, 1
      %p73 = scmp.eq.s32.totalorder %s12, 63
      %p74 = scmp.ne.s32.totalorder %s69, %s71
      %p75 = scmp.eq.s32.totalorder %s12, 0
      %p76 = por %p74, %p75
      %p77 = scmp.ne.s32.totalorder %s69, %s71
      %p78 = scmp.eq.s32.totalorder %s17, 63
      %p79 = por %p77, %p78
      %p80 = scmp.ne.s32.totalorder %s71, %s72
      %p81 = scmp.eq.s32.totalorder %s17, 0
      %p82 = por %p80, %p81
      %p83 = scmp.ne.s32.totalorder %s71, %s72
      %p84 = scmp.eq.s32.totalorder %s18, 63
      %p85 = por %p83, %p84
      %p87 = scmp.ne.s32.totalorder %s72, %s86
      %p88 = scmp.eq.s32.totalorder %s18, 0
      %p89 = por %p87, %p88
      %s91 = sadd.s32 %s90, 1
      %p94 = scmp.eq.s32.totalorder %s12, 63
      %p95 = scmp.ne.s32.totalorder %s90, %s92
      %p96 = scmp.eq.s32.totalorder %s12, 0
      %p97 = por %p95, %p96
      %p98 = scmp.ne.s32.totalorder %s90, %s92
      %p99 = scmp.eq.s32.totalorder %s17, 63
      %p100 = por %p98, %p99
      %p101 = scmp.ne.s32.totalorder %s92, %s93
      %p102 = scmp.eq.s32.totalorder %s17, 0
      %p103 = por %p101, %p102
      %p104 = scmp.ne.s32.totalorder %s92, %s93
      %p105 = scmp.eq.s32.totalorder %s18, 63
      %p106 = por %p104, %p105
      %p108 = scmp.ne.s32.totalorder %s93, %s107
      %p109 = scmp.eq.s32.totalorder %s18, 0
      %p110 = por %p108, %p109
      %s111 = ssub.s32 %s19, %s38
      %s112 = ssub.s32 %s20, %s34
      %s113 = sor.u32 %s111, %s112
      %p114 = scmp.eq.s32.totalorder %s113, 0
      %s116 = sadd.s32 %s115, 1
      %s117 = scalar_select %p114, %s115, %s116
      %p120 = pneg %p114
      %p121 = scmp.eq.s32.totalorder %s12, 63
      %p122 = por %p120, %p121
      %p123 = scmp.ne.s32.totalorder %s115, %s118
      %p124 = scmp.eq.s32.totalorder %s12, 0
      %p125 = por %p123, %p124
      %p126 = scmp.ne.s32.totalorder %s115, %s118
      %p127 = scmp.eq.s32.totalorder %s17, 63
      %p128 = por %p126, %p127
      %p129 = scmp.ne.s32.totalorder %s118, %s119
      %p130 = scmp.eq.s32.totalorder %s17, 0
      %p131 = por %p129, %p130
      %p132 = scmp.ne.s32.totalorder %s118, %s119
      %p133 = scmp.eq.s32.totalorder %s18, 63
      %p134 = por %p132, %p133
      %p136 = scmp.ne.s32.totalorder %s119, %s135
      %p137 = scmp.eq.s32.totalorder %s18, 0
      %p138 = por %p136, %p137
      %p139 = scmp.le.s32.totalorder 1, %s12
      %p140 = scmp.lt.s32.totalorder %s12, 65
      %p141 = pnand %p139, %p140
      %p142 = pneg %p141
      // Predicated region
      $region9: #{tpu_custom_call.1} parent=5 // pred_check
        _
      $region10: #{tpu_custom_call.1} parent=5 // pred_check_branch
        %144 = sbr.rel (%p141) target = $region12
      $region11: #{tpu_custom_call.1} parent=5 // pred_region
        %s145 = ssub.s32 %s12, 1
        // Predicated region
        $region13: #{tpu_custom_call.1} parent=11 // pred_check
          %p146 = pneg %p82
        $region14: #{tpu_custom_call.1} parent=11 // pred_check_branch
          %148 = sbr.rel (%p146) target = $region16
        $region15: #{tpu_custom_call.1} parent=11 // pred_region
          _
        $region16: #{tpu_custom_call.1} parent=11 // pred_fallthru
          _
        // Predicated region
        $region17: #{tpu_custom_call.1} parent=11 // pred_check
          %p149 = pneg %p103
        $region18: #{tpu_custom_call.1} parent=11 // pred_check_branch
          %151 = sbr.rel (%p149) target = $region20
        $region19: #{tpu_custom_call.1} parent=11 // pred_region
          _
        $region20: #{tpu_custom_call.1} parent=11 // pred_fallthru
          _
      $region12: #{tpu_custom_call.1} parent=5 // pred_fallthru
        _
      %p152 = scmp.lt.s32.totalorder %s12, 64
      // Predicated region
      $region21: #{tpu_custom_call.1} parent=5 // pred_check
        %p153 = pneg %p152
      $region22: #{tpu_custom_call.1} parent=5 // pred_check_branch
        %155 = sbr.rel (%p153) target = $region24
      $region23: #{tpu_custom_call.1} parent=5 // pred_region
        // Predicated region
        $region25: #{tpu_custom_call.1} parent=23 // pred_check
          %p156 = pneg %p55
        $region26: #{tpu_custom_call.1} parent=23 // pred_check_branch
          %158 = sbr.rel (%p156) target = $region28
        $region27: #{tpu_custom_call.1} parent=23 // pred_region
          %s159 = sadd.s32 %s20, %s21
          %p160 = scmp.lt.s32.totalorder %s19, 1
          %s161 = scalar_select %p160, %s19, 1
          %p162 = scmp.lt.s32.totalorder %s159, 16
          %s163 = scalar_select %p162, %s159, 16
          %s164 = smul.addr %s163, 3
          %s165 = smul.addr %s161, 51
          %s166 = sadd.s32 %s164, %s165
          %s167 = smul.addr %s166, 4
          %s168 = scalar_lea.vmem %s0, %s167
          %s169 = sadd.s32 %s20, %s21
        $region28: #{tpu_custom_call.1} parent=23 // pred_fallthru
          _
      $region24: #{tpu_custom_call.1} parent=5 // pred_fallthru
        _
      %p170 = scmp.le.s32.totalorder 1, %s12
      %p171 = scmp.lt.s32.totalorder %s12, 65
      %p172 = pnand %p170, %p171
      %p173 = pneg %p172
      // Predicated region
      $region29: #{tpu_custom_call.1} parent=5 // pred_check
        _
      $region30: #{tpu_custom_call.1} parent=5 // pred_check_branch
        %175 = sbr.rel (%p172) target = $region32
      $region31: #{tpu_custom_call.1} parent=5 // pred_region
        %s176 = ssub.s32 %s12, 1
        %s177 = sadd.s32 %s23, %s24
        %p178 = scmp.lt.s32.totalorder %s22, 1
        %s179 = scalar_select %p178, %s22, 1
        %p180 = scmp.lt.s32.totalorder %s177, 16
        %s181 = scalar_select %p180, %s177, 16
        %s182 = smul.addr %s181, 3
        %s183 = smul.addr %s179, 51
        %s184 = sadd.s32 %s182, %s183
        %s185 = smul.addr %s184, 4
        %s186 = scalar_lea.vmem %s0, %s185
        %p187 = pneg %p61
        %p188 = pneg %p58
        %p189 = pneg %p82
        %p190 = pneg %p79
        %p191 = pneg %p103
        %p192 = pneg %p100
        %p193 = pneg %p131
        %p194 = pneg %p128
        %s195 = sand.u32 %s118, 1
        %s196 = scalar_lea.sflag [#allocation4], %s195
        %s197 = sand.u32 %s118, 1
        %s198 = smul.addr %s197, 8
        %s199 = scalar_lea.vmem [#allocation3], %s198
        %s200 = sadd.s32 %s23, %s24
        %p201 = scmp.lt.s32.totalorder %s22, 1
        %s202 = scalar_select %p201, %s22, 1
        %p203 = scmp.lt.s32.totalorder %s200, 16
        %s204 = scalar_select %p203, %s200, 16
        %s205 = smul.addr %s204, 3
        %s206 = smul.addr %s202, 51
        %s207 = sadd.s32 %s205, %s206
        %s208 = smul.addr %s207, 4
        %s209 = scalar_lea.vmem %s0, %s208
        %s210 = sadd.s32 %s23, %s24
        %p212 = scmp.eq.s32.totalorder %s24, 0
        // Predicated region
        $region33: #{tpu_custom_call.1} parent=31 // pred_check
          %p213 = pneg %p212
        $region34: #{tpu_custom_call.1} parent=31 // pred_check_branch
          %215 = sbr.rel (%p213) target = $region36
        $region35: #{tpu_custom_call.1} parent=31 // pred_region
          %216 = vst [vmem:[#allocation2] sm:$0xff] 0.0
          %217 = vst [vmem:[#allocation2 + $0x8] sm:$0xff] 0.0
        $region36: #{tpu_custom_call.1} parent=31 // pred_fallthru
          _
        %v218 = vld [vmem:[%s209] sm:$0xf]
        %v219 = vld [vmem:[%s209 + $0x4] sm:$0xf]
        %v220 = vld [vmem:[%s209 + $0x8] sm:$0x1]
        %v221 = vld [vmem:[#allocation2] sm:$0xff]
        %v222 = vld [vmem:[#allocation2 + $0x8] sm:$0xff]
        %s223 = smul.u32 %s24, 2
        %s224 = smul.u32 %s223, 2
        %s225 = smul.addr %s224, 4
        %s226 = scalar_lea.vmem %s1, %s225
        %v227 = vld [vmem:[%s226] sm:$0xf]
        %v228 = vld [vmem:[%s226 + $0x4] sm:$0xf]
        %v232 = vunpack.c.l.b16 %v218
        %v233 = vunpack.c.l.b16 %v219
        %v234 = vunpack.c.l.b16 %v220
        %v235 = vpack.c.b16 %v233, %v232
        %v236 = vpack.c.b16 %v234, %v234
        %v239 = vunpack.c.l.b16 %v227
        %v240 = vunpack.c.l.b16 %v228
        %v241 = vpack.c.b16 %v240, %v239
        %vm243 = vcmask 130048
        %v245 = vsel %vm243, %v235, 0
        %v248 = vsel %vm243, %v236, 0
        %250 = vmatprep.subr.bf16.mxu0 0
        %251 = vmatpush1.bf16.msra.mxu0 %v241
        %252 = vmatprep.subr.bf16.mxu0 0
        %253 = vmatpush1.bf16.msra.mxu0 0
        %254 = vmatprep.subr.bf16.mxu0 0
        %255 = vmatpush1.bf16.msra.mxu0 0
        %256 = vmatprep.subr.bf16.mxu0 0
        %257 = vmatpush1.bf16.msra.mxu0 0
        %258 = vmatprep.subr.bf16.mxu0 0
        %259 = vmatpush1.bf16.msra.mxu0 0
        %260 = vmatprep.subr.bf16.mxu0 0
        %261 = vmatpush1.bf16.msra.mxu0 0
        %262 = vmatprep.subr.bf16.mxu0 0
        %263 = vmatpush1.bf16.msra.mxu0 0
        %264 = vmatprep.subr.bf16.mxu0 0
        %265 = vmatpush1.bf16.msra.mxu0 0
        %266 = vmatprep.subr.bf16.mxu0 0
        %267 = vmatpush1.bf16.msra.mxu0 0
        %268 = vmatprep.subr.bf16.mxu0 0
        %269 = vmatpush1.bf16.msra.mxu0 0
        %270 = vmatprep.subr.bf16.mxu0 0
        %271 = vmatpush1.bf16.msra.mxu0 0
        %272 = vmatprep.subr.bf16.mxu0 0
        %273 = vmatpush1.bf16.msra.mxu0 0
        %274 = vmatprep.subr.bf16.mxu0 0
        %275 = vmatpush1.bf16.msra.mxu0 0
        %276 = vmatprep.subr.bf16.mxu0 0
        %277 = vmatpush1.bf16.msra.mxu0 0
        %278 = vmatprep.subr.bf16.mxu0 0
        %279 = vmatpush1.bf16.msra.mxu0 0
        %280 = vmatprep.subr.bf16.mxu0 0
        %281 = vmatpush1.bf16.msra.mxu0 0
        %282 = vmatprep.mubr.bf16.mxu0 0
        %283 = vmatmul.mubr.bf16.gmra.mrb[0].mxu0 %v245
        %v284 = vpop.f32.mrb[0].mxu0
        %v285 = vadd.f32 0.0, %v284
        %v286 = vpop.f32.mrb[0].mxu0
        %v287 = vpop.f32.mrb[0].mxu0
        %v288 = vadd.f32 0.0, %v287
        %v289 = vpop.f32.mrb[0].mxu0
        %290 = vmatprep.mubr.bf16.mxu0 0
        %291 = vmatmul.mubr.bf16.gmra.mrb[0].mxu0 %v248
        %v292 = vpop.f32.mrb[0].mxu0
        %v293 = vpop.f32.mrb[0].mxu0
        %v294 = vpop.f32.mrb[0].mxu0
        %v295 = vpop.f32.mrb[0].mxu0
        %296 = vdwg.mxu0
        %v297 = vadd.f32 %v221, %v285
        %v298 = vadd.f32 %v222, %v288
        %s299 = sadd.s32 %s223, 1
        %s300 = smul.u32 %s299, 2
        %s301 = smul.addr %s300, 4
        %s302 = scalar_lea.vmem %s1, %s301
        %v303 = vld [vmem:[%s302] sm:$0xf]
        %v304 = vld [vmem:[%s302 + $0x4] sm:$0xf]
        %v307 = vunpack.c.l.b16 %v303
        %v308 = vunpack.c.l.b16 %v304
        %v309 = vpack.c.b16 %v308, %v307
        %311 = vmatprep.subr.bf16.mxu0 0
        %312 = vmatpush1.bf16.msra.mxu0 %v309
        %313 = vmatprep.subr.bf16.mxu0 0
        %314 = vmatpush1.bf16.msra.mxu0 0
        %315 = vmatprep.subr.bf16.mxu0 0
        %316 = vmatpush1.bf16.msra.mxu0 0
        %317 = vmatprep.subr.bf16.mxu0 0
        %318 = vmatpush1.bf16.msra.mxu0 0
        %319 = vmatprep.subr.bf16.mxu0 0
        %320 = vmatpush1.bf16.msra.mxu0 0
        %321 = vmatprep.subr.bf16.mxu0 0
        %322 = vmatpush1.bf16.msra.mxu0 0
        %323 = vmatprep.subr.bf16.mxu0 0
        %324 = vmatpush1.bf16.msra.mxu0 0
        %325 = vmatprep.subr.bf16.mxu0 0
        %326 = vmatpush1.bf16.msra.mxu0 0
        %327 = vmatprep.subr.bf16.mxu0 0
        %328 = vmatpush1.bf16.msra.mxu0 0
        %329 = vmatprep.subr.bf16.mxu0 0
        %330 = vmatpush1.bf16.msra.mxu0 0
        %331 = vmatprep.subr.bf16.mxu0 0
        %332 = vmatpush1.bf16.msra.mxu0 0
        %333 = vmatprep.subr.bf16.mxu0 0
        %334 = vmatpush1.bf16.msra.mxu0 0
        %335 = vmatprep.subr.bf16.mxu0 0
        %336 = vmatpush1.bf16.msra.mxu0 0
        %337 = vmatprep.subr.bf16.mxu0 0
        %338 = vmatpush1.bf16.msra.mxu0 0
        %339 = vmatprep.subr.bf16.mxu0 0
        %340 = vmatpush1.bf16.msra.mxu0 0
        %341 = vmatprep.subr.bf16.mxu0 0
        %342 = vmatpush1.bf16.msra.mxu0 0
        %343 = vmatprep.mubr.bf16.mxu0 0
        %344 = vmatmul.mubr.bf16.gmra.mrb[0].mxu0 %v245
        %v345 = vpop.f32.mrb[0].mxu0
        %v346 = vadd.f32 0.0, %v345
        %v347 = vpop.f32.mrb[0].mxu0
        %v348 = vpop.f32.mrb[0].mxu0
        %v349 = vadd.f32 0.0, %v348
        %v350 = vpop.f32.mrb[0].mxu0
        %351 = vmatprep.mubr.bf16.mxu0 0
        %352 = vmatmul.mubr.bf16.gmra.mrb[0].mxu0 %v248
        %v353 = vpop.f32.mrb[0].mxu0
        %v354 = vadd.f32 0.0, %v353
        %v355 = vpop.f32.mrb[0].mxu0
        %v356 = vpop.f32.mrb[0].mxu0
        %v357 = vpop.f32.mrb[0].mxu0
        %358 = vdwg.mxu0
        %vm362 = vcmask 1046528
        %v363 = vrot.slane %v346, 1
        %v364 = vrot.slane %v349, 1
        %v365 = vsel %vm362, %v363, %v364
        %v366 = vrot.slane %v354, 1
        %v367 = vsel %vm362, %v364, %v366
        %v370 = vadd.f32 %v297, %v365
        %v371 = vadd.f32 %v298, %v367
        %372 = vst [vmem:[#allocation2] sm:$0xff] %v370
        %373 = vst [vmem:[#allocation2 + $0x8] sm:$0xff] %v371
        %p374 = scmp.eq.s32.totalorder %s24, 1
        // Predicated region
        $region37: #{tpu_custom_call.1} parent=31 // pred_check
          %p375 = pneg %p374
        $region38: #{tpu_custom_call.1} parent=31 // pred_check_branch
          %377 = sbr.rel (%p375) target = $region40
        $region39: #{tpu_custom_call.1} parent=31 // pred_region
          %v378 = vld [vmem:[%s2] sm:$0x1]
          %v380 = vlaneseq
          %v381 = vshrl.u32 %v380, 7
          %v382 = vsub.s32 0, %v381
          %v383 = vrot.slane %v378, %v382
          %v385 = vadd.f32 %v370, %v383
          %v386 = vadd.f32 %v371, %v383
          %vm387 = vcmp.gt.f32.partialorder %v385, 0.0
          %vm388 = vcmp.gt.f32.partialorder %v386, 0.0
          %v389 = vmul.f32 %v385, 0.2
          %v390 = vmul.f32 %v386, 0.2
          %v391 = vsel %vm387, %v385, %v389
          %v392 = vsel %vm388, %v386, %v390
          %v393 = vpack.c.bf16 %v392, %v391
          %v395 = vunpack.c.l.b16 %v393
          %v396 = vunpack.c.h.b16 %v393
          %v397 = vpack.c.b16 %v395, %v395
          %v398 = vpack.c.b16 %v396, %v396
          %401 = vst [vmem:[%s199] sm:$0xf] %v397
          %402 = vst [vmem:[%s199 + $0x4] sm:$0xf] %v398
        $region40: #{tpu_custom_call.1} parent=31 // pred_fallthru
          _
        %s403 = sand.u32 %s118, 1
        %s404 = scalar_lea.sflag [#allocation4], %s403
        %s405 = sand.u32 %s118, 1
        %s406 = smul.addr %s405, 8
        %s407 = scalar_lea.vmem [#allocation3], %s406
        // Predicated region
        $region41: #{tpu_custom_call.1} parent=31 // pred_check
          %p408 = pneg %p128
        $region42: #{tpu_custom_call.1} parent=31 // pred_check_branch
          %410 = sbr.rel (%p408) target = $region44
        $region43: #{tpu_custom_call.1} parent=31 // pred_region
          %s412 = ssub.s32 128, 128
          %413 = vsyncadd %s404, %s412
          %s414 = smul.addr %s23, 2
          %s415 = smul.addr %s22, 32
          %s416 = sadd.s32 %s414, %s415
          %s417 = smul.addr %s416, 64
          %s418 = scalar_lea.hbm %s3, %s417
          %s419 = sshll.u32 %s407, 4
          %s420 = int_to_ptr.vmem [resolvable:$true] %s419
          %425 = dma.vmem_to_hbm [thread:$0]  %s420, 128, %s418, %s404, 64, 64, 4
        $region44: #{tpu_custom_call.1} parent=31 // pred_fallthru
          _
      $region32: #{tpu_custom_call.1} parent=5 // pred_fallthru
        _
      %p426 = scmp.le.s32.totalorder 2, %s12
      // Predicated region
      $region45: #{tpu_custom_call.1} parent=5 // pred_check
        %p427 = pneg %p426
      $region46: #{tpu_custom_call.1} parent=5 // pred_check_branch
        %429 = sbr.rel (%p427) target = $region48
      $region47: #{tpu_custom_call.1} parent=5 // pred_region
        %s430 = ssub.s32 %s12, 2
        // Predicated region
        $region49: #{tpu_custom_call.1} parent=47 // pred_check
          %p431 = pneg %p134
        $region50: #{tpu_custom_call.1} parent=47 // pred_check_branch
          %433 = sbr.rel (%p431) target = $region52
        $region51: #{tpu_custom_call.1} parent=47 // pred_region
          %s434 = sand.u32 %s119, 1
          %s435 = scalar_lea.sflag [#allocation4], %s434
          %s436 = sand.u32 %s119, 1
          %s437 = smul.addr %s436, 8
          %s438 = scalar_lea.vmem [#allocation3], %s437
          %439 = dma.done %s435, 128
        $region52: #{tpu_custom_call.1} parent=47 // pred_fallthru
          _
      $region48: #{tpu_custom_call.1} parent=5 // pred_fallthru
        _
    $region6: #{tpu_custom_call.1} parent=1 // loop_footer
      %s16 = sadd.s32 1, %s12
    $region7: #{tpu_custom_call.1} parent=1 // loop_footer_branch
      %11 = sbr.rel target = $region3
    $region8: #{tpu_custom_call.1} parent=1 // loop_exit
      _
    %440 = vsyncpa [#allocation4], 1
    %s441 = scalar_lea.sflag [#allocation4], 1
    %442 = vsyncpa %s441, 1

</llo_original>
